<compile_context>
chip_gen: v6e
topology: v6e:2x2x1
jax: 0.10.0
libtpu: 0.0.40
codegen_flags: <defaults>
</compile_context>

<pallas_src>
import functools

import jax
import jax.numpy as jnp
from jax.experimental import pallas as pl
from jax.experimental.pallas import tpu as pltpu


def _cdiv(a, b):
    return (a + b - 1) // b


def _round_up(a, b):
    return _cdiv(a, b) * b


# ----------------------------------------------------------------------------
# Pallas kernel: accumulates (per shard) running sums of
#   acc[0] = sum_rows base_criterion_row(outputs1)
#   acc[1] = sum_rows base_criterion_row(outputs2)
#   acc[2] = sum distill_term(outputs1, teacher1)
#   acc[3] = sum distill_term(outputs2, teacher2)
# Teacher logits are produced in-kernel from `inputs` with two deterministic
# linear heads (synthetic stand-in for `create_model`).
# ----------------------------------------------------------------------------
def _pretrain_loss_kernel(x_ref, w_ref, o1_ref, o2_ref, lab_ref, wt_ref,
                          out_ref, acc_ref, *,
                          loss_type, distill_type, targetted, tau,
                          batch, tiles_per_shard):
    f32 = jnp.float32
    s = pl.program_id(0)              # shard (maps to a TensorCore on v7x)
    t = pl.program_id(1)              # batch tile within shard (reduction)
    tb, _ = o1_ref.shape

    # ---- running-sum accumulator (per-core SMEM scratch) --------------------
    @pl.when(t == 0)
    def _init():
        for i in range(4):
            acc_ref[i] = f32(0.0)

    # ---- row-validity mask for the zero-padded tail of the batch ------------
    row0 = (s * tiles_per_shard + t) * tb
    rid = jax.lax.broadcasted_iota(jnp.int32, (tb, 128), 0)[:, :1] + row0
    mask = (rid < batch).astype(f32)                        # (tb, 1)

    o1 = o1_ref[...].astype(f32)                            # bf16 -> f32
    o2 = o2_ref[...].astype(f32)
    lab = lab_ref[...].astype(f32)
    # hoisted log(weighting); like the torch reference this assumes weighting>0
    # (non-positive weights give -inf/NaN in torch as well).
    logw = jnp.log(wt_ref[...])                             # (1, C) f32

    # ---- teacher forward: two linear heads from the stacked bf16 weight -----
    # TODO(synk): stand-in for the create_model(...) teacher; bias-free heads.
    x = x_ref[...]                                          # (tb, D) bf16
    t1 = jnp.dot(x, w_ref[0], preferred_element_type=f32)   # (tb, C)
    t2 = jnp.dot(x, w_ref[1], preferred_element_type=f32)

    # labels = labels / labels.sum(dim=1, keepdim=True)  (softCE / smoothCE)
    if loss_type in ("softCE", "smoothCE"):
        lsum = jnp.sum(lab, axis=1, keepdims=True)
        lab = lab / jnp.where(lsum > 0, lsum, f32(1.0))     # padded rows stay 0
        lab_sum = None                                      # rows sum to 1 (or 0)
    else:
        lab_sum = jnp.sum(lab, axis=1, keepdims=True)

    # ---- softmax building blocks: ONE exp per tensor, reused everywhere -----
    def parts(z):
        m = jnp.max(z, axis=-1, keepdims=True)
        zs = z - m
        e = jnp.exp(zs)
        return zs, e, jnp.sum(e, axis=-1, keepdims=True)

    def soft_ce_rows(p, pz, psum=None):
        # -sum_c p*log_softmax(z) = (sum_c p)*log(sum_c e^{z-m}) - sum_c p*(z-m)
        zs, _, se = pz
        lse = jnp.log(se)
        if psum is not None:
            lse = psum * lse
        return lse - jnp.sum(p * zs, axis=-1, keepdims=True)    # (tb, 1)

    # TODO(synk): base_criterion is an injected nn.Module in the original code;
    # synthesized here as a weighting-adjusted soft cross-entropy.
    pw1 = parts(o1 + logw)
    pw2 = parts(o2 + logw)
    loss1_rows = soft_ce_rows(lab, pw1, lab_sum)
    loss2_rows = soft_ce_rows(lab, pw2, lab_sum)

    # TODO(synk): on v6e/v7x the teacher-side exp could run in bf16 to relieve
    # the EUP slot if precision allows; kept f32 so v5e and the check share a path.
    if distill_type == "logits_kl":
        # F.kl_div(log_softmax(o/T), log_softmax(t/T), 'sum', log_target=True);
        # raw sum accumulated here; * T*T / (B*C) applied in the wrapper
        # (matches torch's reduction='sum' then division by outputs.numel()).
        inv_tau = f32(1.0 / tau)

        def kl_rows(o, tch):
            zs_o, _, se_o = parts(o * inv_tau)
            zs_t, e_t, se_t = parts(tch * inv_tau)
            st = e_t / se_t
            # sum st*(lsm_t - lsm_o) = sum st*(zs_t - zs_o) + log se_o - log se_t
            return (jnp.sum(st * (zs_t - zs_o), axis=-1, keepdims=True)
                    + jnp.log(se_o) - jnp.log(se_t))

        d1_rows = kl_rows(o1, t1)
        d2_rows = kl_rows(o2, t2)
    elif targetted:   # distill_type == 'logits', targetted distillation
        # lgadjusted_cross_entropy_for_distillation.
        # TODO(synk): kept faithful to the torch reference, including its double
        # negation (result is the negative of a cross-entropy) and keepdim row
        # sums (the torch sum without keepdim only broadcasts when B == C).
        def lgadj_rows(pz_ow, tch):
            _, e_t, se_t = parts(tch + logw)
            return -soft_ce_rows(e_t / se_t, pz_ow)          # reuses pw1 / pw2

        d1_rows = lgadj_rows(pw1, t1)
        d2_rows = lgadj_rows(pw2, t2)
    else:             # distill_type == 'logits', plain cross_entropy
        def ce_rows(o, tch):
            _, e_t, se_t = parts(tch)
            return soft_ce_rows(e_t / se_t, parts(o))

        d1_rows = ce_rows(o1, t1)
        d2_rows = ce_rows(o2, t2)

    acc_ref[0] += jnp.sum(mask * loss1_rows)
    acc_ref[1] += jnp.sum(mask * loss2_rows)
    acc_ref[2] += jnp.sum(mask * d1_rows)
    acc_ref[3] += jnp.sum(mask * d2_rows)

    # ---- write this shard's partial sums once, on the last reduction step ---
    @pl.when(t == pl.num_programs(1) - 1)
    def _finalize():
        out_ref[0] = jnp.concatenate(
            [jnp.full((1, 128), acc_ref[i], f32) for i in range(4)], axis=0)


# ----------------------------------------------------------------------------
# Wrapper: chip-aware tiling + scalar mixing
# ----------------------------------------------------------------------------
def _device_kind():
    try:
        return jax.devices()[0].device_kind.lower()
    except Exception:
        return ""


def _vmem_limit_bytes():
    try:
        phys = getattr(pltpu.get_tpu_info(), "vmem_capacity_bytes", None)
    except Exception:
        phys = None
    if not phys:
        phys = 64 * 1024 * 1024       # conservative fallback (v7x per-TC VMEM)
    # ~75% of physical, capped at 100 MiB: ~96 MiB on v5e/v6e, ~48 MiB on v7x.
    return int(min(phys * 3 // 4, 100 * 1024 * 1024))


def _default_num_shards():
    kind = _device_kind()
    return 2 if ("v7" in kind or "7x" in kind) else 1      # 2 TCs only on v7x


def _resident_spec(block_shape, index_map, nbytes):
    """BlockSpec for a grid-invariant operand; single-buffer it when big."""
    if nbytes >= (1 << 20):
        try:
            return pl.BlockSpec(block_shape, index_map,
                                pipeline_mode=pl.Buffered(1))
        except TypeError:             # jax without BlockSpec.pipeline_mode
            pass
    return pl.BlockSpec(block_shape, index_map)


def pretrain_sent_loss(inputs, outputs, labels, weighting, *,
                       teacher_w1, teacher_w2,
                       loss_type="softCE", distill_type="logits",
                       alpha=0.0, beta=0.5, tau=1.0,
                       targetted_distillation=False,
                       num_shards=None, block_rows=None, core_parallel=False,
                       stream_dtype=jnp.bfloat16):
    """JAX/Pallas port of PretrainSentLoss.forward (tuple-outputs path).

    TODO(synk): the single-tensor `outputs` path and the alpha>0 'feat'
    distillation path of the original module are not implemented here.
    """
    outputs1, outputs2 = outputs
    B, C = outputs1.shape
    D = inputs.shape[1]

    if num_shards is None:
        num_shards = _default_num_shards()
    vmem_limit = _vmem_limit_bytes()

    # ---- batch tile size derived from the VMEM budget ----------------------
    ebytes = jnp.dtype(stream_dtype).itemsize              # 2 for bf16
    sub = 8 * (4 // ebytes)                                 # 16-row tiles (bf16)
    resident = 2 * D * C * ebytes + C * 4                   # teacher W + weighting
    # per batch-row: double-buffered streamed blocks + ~8 live f32 (., C) temps
    per_row = 2 * (D + 3 * C) * ebytes + 8 * C * 4
    budget = (vmem_limit * 3) // 4 - resident
    tb_cap = (budget // per_row) // sub * sub if budget > per_row * sub else sub
    tb_cap = min(max(tb_cap, sub), 1024)
    if block_rows is not None:
        tb_cap = max(sub, min(tb_cap, _round_up(block_rows, sub)))

    rows_per_shard = _round_up(_cdiv(B, num_shards), sub)
    tb = min(tb_cap, rows_per_shard)
    tiles_per_shard = _cdiv(rows_per_shard, tb)
    tb = _round_up(_cdiv(rows_per_shard, tiles_per_shard), sub)  # minimise padding
    b_pad = num_shards * tiles_per_shard * tb

    # ---- operands: bf16 streamed rows; pad only when actually needed --------
    def prep(a):
        if a.dtype != stream_dtype:
            a = a.astype(stream_dtype)
        if a.shape[0] != b_pad:
            a = jnp.pad(a, ((0, b_pad - a.shape[0]), (0, 0)))
        return a

    x, o1, o2, lab = prep(inputs), prep(outputs1), prep(outputs2), prep(labels)
    w2d = weighting.reshape(1, C).astype(jnp.float32)
    w_stack = jnp.stack([teacher_w1, teacher_w2], 0).astype(stream_dtype)  # (2,D,C)

    kernel = functools.partial(
        _pretrain_loss_kernel,
        loss_type=loss_type, distill_type=distill_type,
        targetted=targetted_distillation, tau=float(tau),
        batch=B, tiles_per_shard=tiles_per_shard)

    row_spec_c = pl.BlockSpec((tb, C), lambda s, t: (s * tiles_per_shard + t, 0))
    row_spec_d = pl.BlockSpec((tb, D), lambda s, t: (s * tiles_per_shard + t, 0))
    w_spec = _resident_spec((2, D, C), lambda s, t: (0, 0, 0), 2 * D * C * ebytes)
    wt_spec = _resident_spec((1, C), lambda s, t: (0, 0), C * 4)

    if core_parallel and num_shards > 1:
        # TODO(synk): verify in the lowered MLIR that this splits the shard
        # axis across v7x's two TensorCores.
        dims = (pltpu.CORE_PARALLEL, pltpu.ARBITRARY)
    else:
        dims = ("parallel", "arbitrary")

    res = pl.pallas_call(
        kernel,
        out_shape=jax.ShapeDtypeStruct((num_shards, 4, 128), jnp.float32),
        grid_spec=pltpu.PrefetchScalarGridSpec(
            num_scalar_prefetch=0,
            grid=(num_shards, tiles_per_shard),
            in_specs=[row_spec_d, w_spec, row_spec_c, row_spec_c, row_spec_c,
                      wt_spec],
            out_specs=pl.BlockSpec((1, 4, 128), lambda s, t: (s, 0, 0)),
            scratch_shapes=[pltpu.SMEM((4,), jnp.float32)]),
        compiler_params=pltpu.CompilerParams(
            dimension_semantics=dims,
            vmem_limit_bytes=vmem_limit),
    )(x, w_stack, o1, o2, lab, w2d)

    # per-shard running sums -> global sums -> means (use true B, C)
    sums = jnp.sum(res[:, :, 0], axis=0)                    # (4,)
    loss1 = sums[0] / B
    loss2 = sums[1] / B
    if distill_type == "logits_kl":
        scale = (tau * tau) / (B * C)                        # 'sum' / numel
        d1, d2 = sums[2] * scale, sums[3] * scale
    else:
        d1, d2 = sums[2] / B, sums[3] / B

    # alpha == 0 path of forward(): no 'feat' distill term.
    distill_loss = jnp.float32(0.0)
    base_loss = (loss1 + loss2) / 2.0
    loss = (1.0 - alpha) * base_loss + alpha * distill_loss
    if beta > 0:
        distill_loss = (d1 + d2) / 2.0
        loss = (1.0 - beta) * loss + beta * distill_loss
    return loss, distill_loss


# ----------------------------------------------------------------------------
# Pure-JAX reference (for correctness check only; same bf16-rounded operands)
# ----------------------------------------------------------------------------
def _reference(inputs, o1, o2, labels, weighting, w1, w2, alpha, beta,
               stream_dtype=jnp.bfloat16):
    f32 = jnp.float32
    cast = lambda a: a.astype(stream_dtype).astype(f32)
    o1, o2, lab = cast(o1), cast(o2), cast(labels)
    x = inputs.astype(stream_dtype)
    t1 = jnp.dot(x, w1.astype(stream_dtype), preferred_element_type=f32)
    t2 = jnp.dot(x, w2.astype(stream_dtype), preferred_element_type=f32)
    lab = lab / jnp.sum(lab, axis=1, keepdims=True)
    logw = jnp.log(weighting)[None, :]

    def base(o):
        lp = jax.nn.log_softmax(o + logw, axis=-1)
        return jnp.mean(-jnp.sum(lab * lp, axis=-1))

    def ce(o, t):
        lp = jax.nn.log_softmax(o, axis=-1)
        st = jax.nn.softmax(t, axis=-1)
        return jnp.mean(-jnp.sum(st * lp, axis=-1))

    base_loss = (base(o1) + base(o2)) / 2.0
    loss = (1.0 - alpha) * base_loss
    distill = (ce(o1, t1) + ce(o2, t2)) / 2.0
    loss = (1.0 - beta) * loss + beta * distill
    return loss, distill


if __name__ == "__main__":
    B, D, C = 8, 32, 128
    key = jax.random.PRNGKey(0)
    k1, k2, k3, k4, k5, k6, k7 = jax.random.split(key, 7)

    inputs = jax.random.normal(k1, (B, D), dtype=jnp.float32)
    outputs1 = jax.random.normal(k2, (B, C), dtype=jnp.float32)
    outputs2 = jax.random.normal(k3, (B, C), dtype=jnp.float32)
    labels = jax.random.uniform(k4, (B, C), dtype=jnp.float32,
                                minval=0.1, maxval=1.0)
    weighting = jax.random.uniform(k5, (C,), dtype=jnp.float32,
                                   minval=0.5, maxval=1.5)
    # deterministic synthetic teacher heads (stand-in for create_model teacher)
    teacher_w1 = 0.1 * jax.random.normal(k6, (D, C), dtype=jnp.float32)
    teacher_w2 = 0.1 * jax.random.normal(k7, (D, C), dtype=jnp.float32)

    alpha, beta, tau = 0.0, 0.5, 1.0

    loss, distill_loss = pretrain_sent_loss(
        inputs, (outputs1, outputs2), labels, weighting,
        teacher_w1=teacher_w1, teacher_w2=teacher_w2,
        loss_type="softCE", distill_type="logits",
        alpha=alpha, beta=beta, tau=tau, targetted_distillation=False,
    )
    loss = jax.block_until_ready(loss)
    distill_loss = jax.block_until_ready(distill_loss)

    ref_loss, ref_distill = _reference(inputs, outputs1, outputs2, labels,
                                       weighting, teacher_w1, teacher_w2,
                                       alpha, beta)

    assert jnp.allclose(loss, ref_loss, rtol=1e-3, atol=1e-5), (loss, ref_loss)
    assert jnp.allclose(distill_loss, ref_distill, rtol=1e-3, atol=1e-5), (
        distill_loss, ref_distill)

    print("KERNEL_OK")
</pallas_src>

<mosaic_0001>
module attributes {stable_mosaic.version = 11 : i64} {
  func.func @_pretrain_loss_kernel(%arg0: i32, %arg1: i32, %arg2: memref<16x32xbf16, #tpu.memory_space<vmem>>, %arg3: memref<2x32x128xbf16, #tpu.memory_space<vmem>>, %arg4: memref<16x128xbf16, #tpu.memory_space<vmem>>, %arg5: memref<16x128xbf16, #tpu.memory_space<vmem>>, %arg6: memref<16x128xbf16, #tpu.memory_space<vmem>>, %arg7: memref<1x128xf32, #tpu.memory_space<vmem>>, %arg8: memref<1x4x128xf32, #tpu.memory_space<vmem>>, %arg9: memref<4xf32, #tpu.memory_space<smem>>) attributes {dimension_semantics = [#tpu.dimension_semantics<parallel>, #tpu.dimension_semantics<arbitrary>], iteration_bounds = array<i64: 1, 1>, scalar_prefetch = 0 : i64, scratch_operands = 1 : i64, tpu.core_type = #tpu.core_type<tc>, window_params = [{transform_indices = @transform_0, window_bounds = array<i64: 16, 32>}, {pipeline_mode = #tpu.pipeline_mode<synchronous>, transform_indices = @transform_1, window_bounds = array<i64: 2, 32, 128>}, {transform_indices = @transform_2, window_bounds = array<i64: 16, 128>}, {transform_indices = @transform_3, window_bounds = array<i64: 16, 128>}, {transform_indices = @transform_4, window_bounds = array<i64: 16, 128>}, {pipeline_mode = #tpu.pipeline_mode<synchronous>, transform_indices = @transform_5, window_bounds = array<i64: 1, 128>}, {transform_indices = @transform_6, window_bounds = array<i64: 1, 4, 128>}]} {
    %c0_i32 = arith.constant 0 : i32
    %0 = arith.cmpi eq, %arg1, %c0_i32 : i32
    %1 = arith.extui %0 : i1 to i32
    %c0_i32_0 = arith.constant 0 : i32
    %2 = arith.cmpi ne, %1, %c0_i32_0 : i32
    scf.if %2 {
      %cst_47 = arith.constant 0.000000e+00 : f32
      %c0_48 = arith.constant 0 : index
      %142 = memref.load %arg9[%c0_48] : memref<4xf32, #tpu.memory_space<smem>>
      memref.store %cst_47, %arg9[%c0_48] : memref<4xf32, #tpu.memory_space<smem>>
      %cst_49 = arith.constant 0.000000e+00 : f32
      %c1_50 = arith.constant 1 : index
      %143 = memref.load %arg9[%c1_50] : memref<4xf32, #tpu.memory_space<smem>>
      memref.store %cst_49, %arg9[%c1_50] : memref<4xf32, #tpu.memory_space<smem>>
      %cst_51 = arith.constant 0.000000e+00 : f32
      %c2_52 = arith.constant 2 : index
      %144 = memref.load %arg9[%c2_52] : memref<4xf32, #tpu.memory_space<smem>>
      memref.store %cst_51, %arg9[%c2_52] : memref<4xf32, #tpu.memory_space<smem>>
      %cst_53 = arith.constant 0.000000e+00 : f32
      %c3_54 = arith.constant 3 : index
      %145 = memref.load %arg9[%c3_54] : memref<4xf32, #tpu.memory_space<smem>>
      memref.store %cst_53, %arg9[%c3_54] : memref<4xf32, #tpu.memory_space<smem>>
    } else {
    }
    %c1_i32 = arith.constant 1 : i32
    %3 = arith.muli %arg0, %c1_i32 : i32
    %4 = arith.addi %3, %arg1 : i32
    %c16_i32 = arith.constant 16 : i32
    %5 = arith.muli %4, %c16_i32 : i32
    %6 = tpu.iota {dimensions = array<i32: 0>} : vector<16x128xi32>
    %7 = vector.extract_strided_slice %6 {offsets = [0, 0], sizes = [16, 1], strides = [1, 1]} : vector<16x128xi32> to vector<16x1xi32>
    %8 = vector.broadcast %5 : i32 to vector<16x1xi32>
    %9 = arith.addi %7, %8 : vector<16x1xi32>
    %c8_i32 = arith.constant 8 : i32
    %10 = vector.broadcast %c8_i32 : i32 to vector<16x1xi32>
    %11 = arith.cmpi slt, %9, %10 : vector<16x1xi32>
    %12 = arith.extui %11 : vector<16x1xi1> to vector<16x1xi32>
    %13 = arith.sitofp %12 : vector<16x1xi32> to vector<16x1xf32>
    %c0 = arith.constant 0 : index
    %c0_1 = arith.constant 0 : index
    %14 = vector.load %arg4[%c0, %c0_1] : memref<16x128xbf16, #tpu.memory_space<vmem>>, vector<16x128xbf16>
    %15 = arith.extf %14 : vector<16x128xbf16> to vector<16x128xf32>
    %c0_2 = arith.constant 0 : index
    %c0_3 = arith.constant 0 : index
    %16 = vector.load %arg5[%c0_2, %c0_3] : memref<16x128xbf16, #tpu.memory_space<vmem>>, vector<16x128xbf16>
    %17 = arith.extf %16 : vector<16x128xbf16> to vector<16x128xf32>
    %c0_4 = arith.constant 0 : index
    %c0_5 = arith.constant 0 : index
    %18 = vector.load %arg6[%c0_4, %c0_5] : memref<16x128xbf16, #tpu.memory_space<vmem>>, vector<16x128xbf16>
    %19 = arith.extf %18 : vector<16x128xbf16> to vector<16x128xf32>
    %c0_6 = arith.constant 0 : index
    %c0_7 = arith.constant 0 : index
    %20 = vector.load %arg7[%c0_6, %c0_7] : memref<1x128xf32, #tpu.memory_space<vmem>>, vector<1x128xf32>
    %21 = math.log %20 : vector<1x128xf32>
    %c0_8 = arith.constant 0 : index
    %c0_9 = arith.constant 0 : index
    %22 = vector.load %arg2[%c0_8, %c0_9] : memref<16x32xbf16, #tpu.memory_space<vmem>>, vector<16x32xbf16>
    %c0_10 = arith.constant 0 : index
    %c0_11 = arith.constant 0 : index
    %c0_12 = arith.constant 0 : index
    %23 = vector.load %arg3[%c0_10, %c0_11, %c0_12] : memref<2x32x128xbf16, #tpu.memory_space<vmem>>, vector<1x32x128xbf16>
    %24 = vector.shape_cast %23 : vector<1x32x128xbf16> to vector<32x128xbf16>
    %cst = arith.constant dense<0.000000e+00> : vector<16x128xf32>
    %25 = tpu.matmul %22, %24, %cst {dimension_numbers = #tpu.dot_dimension_numbers<[1], [0], [0], [1], [0, 0, 1, 1], [], []>} : vector<16x32xbf16>, vector<32x128xbf16>, vector<16x128xf32> -> vector<16x128xf32>
    %c1 = arith.constant 1 : index
    %c0_13 = arith.constant 0 : index
    %c0_14 = arith.constant 0 : index
    %26 = vector.load %arg3[%c1, %c0_13, %c0_14] : memref<2x32x128xbf16, #tpu.memory_space<vmem>>, vector<1x32x128xbf16>
    %27 = vector.shape_cast %26 : vector<1x32x128xbf16> to vector<32x128xbf16>
    %cst_15 = arith.constant dense<0.000000e+00> : vector<16x128xf32>
    %28 = tpu.matmul %22, %27, %cst_15 {dimension_numbers = #tpu.dot_dimension_numbers<[1], [0], [0], [1], [0, 0, 1, 1], [], []>} : vector<16x32xbf16>, vector<32x128xbf16>, vector<16x128xf32> -> vector<16x128xf32>
    %cst_16 = arith.constant dense<0.000000e+00> : vector<16xf32>
    %29 = vector.multi_reduction <add>, %19, %cst_16 [1] : vector<16x128xf32> to vector<16xf32>
    %30 = vector.shape_cast %29 : vector<16xf32> to vector<16x1xf32>
    %cst_17 = arith.constant 0.000000e+00 : f32
    %31 = vector.broadcast %cst_17 : f32 to vector<16x1xf32>
    %32 = arith.cmpf ogt, %30, %31 : vector<16x1xf32>
    %cst_18 = arith.constant 1.000000e+00 : f32
    %33 = vector.broadcast %cst_18 : f32 to vector<16x1xf32>
    %34 = arith.select %32, %30, %33 : vector<16x1xi1>, vector<16x1xf32>
    %35 = vector.broadcast %34 : vector<16x1xf32> to vector<16x128xf32>
    %36 = arith.divf %19, %35 : vector<16x128xf32>
    %37 = vector.broadcast %21 : vector<1x128xf32> to vector<16x128xf32>
    %38 = arith.addf %15, %37 : vector<16x128xf32>
    %cst_19 = arith.constant dense<0xFF800000> : vector<16xf32>
    %39 = vector.multi_reduction <maximumf>, %38, %cst_19 [1] : vector<16x128xf32> to vector<16xf32>
    %40 = vector.shape_cast %39 : vector<16xf32> to vector<16x1xf32>
    %41 = vector.broadcast %40 : vector<16x1xf32> to vector<16x128xf32>
    %42 = arith.subf %38, %41 : vector<16x128xf32>
    %43 = math.exp %42 : vector<16x128xf32>
    %cst_20 = arith.constant dense<0.000000e+00> : vector<16xf32>
    %44 = vector.multi_reduction <add>, %43, %cst_20 [1] : vector<16x128xf32> to vector<16xf32>
    %45 = vector.shape_cast %44 : vector<16xf32> to vector<16x1xf32>
    %46 = vector.broadcast %21 : vector<1x128xf32> to vector<16x128xf32>
    %47 = arith.addf %17, %46 : vector<16x128xf32>
    %cst_21 = arith.constant dense<0xFF800000> : vector<16xf32>
    %48 = vector.multi_reduction <maximumf>, %47, %cst_21 [1] : vector<16x128xf32> to vector<16xf32>
    %49 = vector.shape_cast %48 : vector<16xf32> to vector<16x1xf32>
    %50 = vector.broadcast %49 : vector<16x1xf32> to vector<16x128xf32>
    %51 = arith.subf %47, %50 : vector<16x128xf32>
    %52 = math.exp %51 : vector<16x128xf32>
    %cst_22 = arith.constant dense<0.000000e+00> : vector<16xf32>
    %53 = vector.multi_reduction <add>, %52, %cst_22 [1] : vector<16x128xf32> to vector<16xf32>
    %54 = vector.shape_cast %53 : vector<16xf32> to vector<16x1xf32>
    %55 = math.log %45 : vector<16x1xf32>
    %56 = arith.mulf %36, %42 : vector<16x128xf32>
    %cst_23 = arith.constant dense<0.000000e+00> : vector<16xf32>
    %57 = vector.multi_reduction <add>, %56, %cst_23 [1] : vector<16x128xf32> to vector<16xf32>
    %58 = vector.shape_cast %57 : vector<16xf32> to vector<16x1xf32>
    %59 = arith.subf %55, %58 : vector<16x1xf32>
    %60 = math.log %54 : vector<16x1xf32>
    %61 = arith.mulf %36, %51 : vector<16x128xf32>
    %cst_24 = arith.constant dense<0.000000e+00> : vector<16xf32>
    %62 = vector.multi_reduction <add>, %61, %cst_24 [1] : vector<16x128xf32> to vector<16xf32>
    %63 = vector.shape_cast %62 : vector<16xf32> to vector<16x1xf32>
    %64 = arith.subf %60, %63 : vector<16x1xf32>
    %cst_25 = arith.constant dense<0xFF800000> : vector<16xf32>
    %65 = vector.multi_reduction <maximumf>, %25, %cst_25 [1] : vector<16x128xf32> to vector<16xf32>
    %66 = vector.shape_cast %65 : vector<16xf32> to vector<16x1xf32>
    %67 = vector.broadcast %66 : vector<16x1xf32> to vector<16x128xf32>
    %68 = arith.subf %25, %67 : vector<16x128xf32>
    %69 = math.exp %68 : vector<16x128xf32>
    %cst_26 = arith.constant dense<0.000000e+00> : vector<16xf32>
    %70 = vector.multi_reduction <add>, %69, %cst_26 [1] : vector<16x128xf32> to vector<16xf32>
    %71 = vector.shape_cast %70 : vector<16xf32> to vector<16x1xf32>
    %72 = vector.broadcast %71 : vector<16x1xf32> to vector<16x128xf32>
    %73 = arith.divf %69, %72 : vector<16x128xf32>
    %cst_27 = arith.constant dense<0xFF800000> : vector<16xf32>
    %74 = vector.multi_reduction <maximumf>, %15, %cst_27 [1] : vector<16x128xf32> to vector<16xf32>
    %75 = vector.shape_cast %74 : vector<16xf32> to vector<16x1xf32>
    %76 = vector.broadcast %75 : vector<16x1xf32> to vector<16x128xf32>
    %77 = arith.subf %15, %76 : vector<16x128xf32>
    %78 = math.exp %77 : vector<16x128xf32>
    %cst_28 = arith.constant dense<0.000000e+00> : vector<16xf32>
    %79 = vector.multi_reduction <add>, %78, %cst_28 [1] : vector<16x128xf32> to vector<16xf32>
    %80 = vector.shape_cast %79 : vector<16xf32> to vector<16x1xf32>
    %81 = math.log %80 : vector<16x1xf32>
    %82 = arith.mulf %73, %77 : vector<16x128xf32>
    %cst_29 = arith.constant dense<0.000000e+00> : vector<16xf32>
    %83 = vector.multi_reduction <add>, %82, %cst_29 [1] : vector<16x128xf32> to vector<16xf32>
    %84 = vector.shape_cast %83 : vector<16xf32> to vector<16x1xf32>
    %85 = arith.subf %81, %84 : vector<16x1xf32>
    %cst_30 = arith.constant dense<0xFF800000> : vector<16xf32>
    %86 = vector.multi_reduction <maximumf>, %28, %cst_30 [1] : vector<16x128xf32> to vector<16xf32>
    %87 = vector.shape_cast %86 : vector<16xf32> to vector<16x1xf32>
    %88 = vector.broadcast %87 : vector<16x1xf32> to vector<16x128xf32>
    %89 = arith.subf %28, %88 : vector<16x128xf32>
    %90 = math.exp %89 : vector<16x128xf32>
    %cst_31 = arith.constant dense<0.000000e+00> : vector<16xf32>
    %91 = vector.multi_reduction <add>, %90, %cst_31 [1] : vector<16x128xf32> to vector<16xf32>
    %92 = vector.shape_cast %91 : vector<16xf32> to vector<16x1xf32>
    %93 = vector.broadcast %92 : vector<16x1xf32> to vector<16x128xf32>
    %94 = arith.divf %90, %93 : vector<16x128xf32>
    %cst_32 = arith.constant dense<0xFF800000> : vector<16xf32>
    %95 = vector.multi_reduction <maximumf>, %17, %cst_32 [1] : vector<16x128xf32> to vector<16xf32>
    %96 = vector.shape_cast %95 : vector<16xf32> to vector<16x1xf32>
    %97 = vector.broadcast %96 : vector<16x1xf32> to vector<16x128xf32>
    %98 = arith.subf %17, %97 : vector<16x128xf32>
    %99 = math.exp %98 : vector<16x128xf32>
    %cst_33 = arith.constant dense<0.000000e+00> : vector<16xf32>
    %100 = vector.multi_reduction <add>, %99, %cst_33 [1] : vector<16x128xf32> to vector<16xf32>
    %101 = vector.shape_cast %100 : vector<16xf32> to vector<16x1xf32>
    %102 = math.log %101 : vector<16x1xf32>
    %103 = arith.mulf %94, %98 : vector<16x128xf32>
    %cst_34 = arith.constant dense<0.000000e+00> : vector<16xf32>
    %104 = vector.multi_reduction <add>, %103, %cst_34 [1] : vector<16x128xf32> to vector<16xf32>
    %105 = vector.shape_cast %104 : vector<16xf32> to vector<16x1xf32>
    %106 = arith.subf %102, %105 : vector<16x1xf32>
    %c0_35 = arith.constant 0 : index
    %107 = memref.load %arg9[%c0_35] : memref<4xf32, #tpu.memory_space<smem>>
    %108 = arith.mulf %13, %59 : vector<16x1xf32>
    %109 = vector.shape_cast %108 : vector<16x1xf32> to vector<1x16x1xf32>
    %cst_36 = arith.constant dense<0.000000e+00> : vector<1xf32>
    %110 = vector.multi_reduction <add>, %109, %cst_36 [1, 2] : vector<1x16x1xf32> to vector<1xf32>
    %111 = vector.shape_cast %110 : vector<1xf32> to vector<1x1x1xf32>
    %112 = vector.extract %111[0, 0, 0] : f32 from vector<1x1x1xf32>
    %113 = arith.addf %107, %112 : f32
    %c0_37 = arith.constant 0 : index
    %114 = memref.load %arg9[%c0_37] : memref<4xf32, #tpu.memory_space<smem>>
    memref.store %113, %arg9[%c0_37] : memref<4xf32, #tpu.memory_space<smem>>
    %c1_38 = arith.constant 1 : index
    %115 = memref.load %arg9[%c1_38] : memref<4xf32, #tpu.memory_space<smem>>
    %116 = arith.mulf %13, %64 : vector<16x1xf32>
    %117 = vector.shape_cast %116 : vector<16x1xf32> to vector<1x16x1xf32>
    %cst_39 = arith.constant dense<0.000000e+00> : vector<1xf32>
    %118 = vector.multi_reduction <add>, %117, %cst_39 [1, 2] : vector<1x16x1xf32> to vector<1xf32>
    %119 = vector.shape_cast %118 : vector<1xf32> to vector<1x1x1xf32>
    %120 = vector.extract %119[0, 0, 0] : f32 from vector<1x1x1xf32>
    %121 = arith.addf %115, %120 : f32
    %c1_40 = arith.constant 1 : index
    %122 = memref.load %arg9[%c1_40] : memref<4xf32, #tpu.memory_space<smem>>
    memref.store %121, %arg9[%c1_40] : memref<4xf32, #tpu.memory_space<smem>>
    %c2 = arith.constant 2 : index
    %123 = memref.load %arg9[%c2] : memref<4xf32, #tpu.memory_space<smem>>
    %124 = arith.mulf %13, %85 : vector<16x1xf32>
    %125 = vector.shape_cast %124 : vector<16x1xf32> to vector<1x16x1xf32>
    %cst_41 = arith.constant dense<0.000000e+00> : vector<1xf32>
    %126 = vector.multi_reduction <add>, %125, %cst_41 [1, 2] : vector<1x16x1xf32> to vector<1xf32>
    %127 = vector.shape_cast %126 : vector<1xf32> to vector<1x1x1xf32>
    %128 = vector.extract %127[0, 0, 0] : f32 from vector<1x1x1xf32>
    %129 = arith.addf %123, %128 : f32
    %c2_42 = arith.constant 2 : index
    %130 = memref.load %arg9[%c2_42] : memref<4xf32, #tpu.memory_space<smem>>
    memref.store %129, %arg9[%c2_42] : memref<4xf32, #tpu.memory_space<smem>>
    %c3 = arith.constant 3 : index
    %131 = memref.load %arg9[%c3] : memref<4xf32, #tpu.memory_space<smem>>
    %132 = arith.mulf %13, %106 : vector<16x1xf32>
    %133 = vector.shape_cast %132 : vector<16x1xf32> to vector<1x16x1xf32>
    %cst_43 = arith.constant dense<0.000000e+00> : vector<1xf32>
    %134 = vector.multi_reduction <add>, %133, %cst_43 [1, 2] : vector<1x16x1xf32> to vector<1xf32>
    %135 = vector.shape_cast %134 : vector<1xf32> to vector<1x1x1xf32>
    %136 = vector.extract %135[0, 0, 0] : f32 from vector<1x1x1xf32>
    %137 = arith.addf %131, %136 : f32
    %c3_44 = arith.constant 3 : index
    %138 = memref.load %arg9[%c3_44] : memref<4xf32, #tpu.memory_space<smem>>
    memref.store %137, %arg9[%c3_44] : memref<4xf32, #tpu.memory_space<smem>>
    %c0_i32_45 = arith.constant 0 : i32
    %139 = arith.cmpi eq, %arg1, %c0_i32_45 : i32
    %140 = arith.extui %139 : i1 to i32
    %c0_i32_46 = arith.constant 0 : i32
    %141 = arith.cmpi ne, %140, %c0_i32_46 : i32
    scf.if %141 {
      %c0_47 = arith.constant 0 : index
      %142 = memref.load %arg9[%c0_47] : memref<4xf32, #tpu.memory_space<smem>>
      %143 = vector.broadcast %142 : f32 to vector<1x128xf32>
      %c1_48 = arith.constant 1 : index
      %144 = memref.load %arg9[%c1_48] : memref<4xf32, #tpu.memory_space<smem>>
      %145 = vector.broadcast %144 : f32 to vector<1x128xf32>
      %c2_49 = arith.constant 2 : index
      %146 = memref.load %arg9[%c2_49] : memref<4xf32, #tpu.memory_space<smem>>
      %147 = vector.broadcast %146 : f32 to vector<1x128xf32>
      %c3_50 = arith.constant 3 : index
      %148 = memref.load %arg9[%c3_50] : memref<4xf32, #tpu.memory_space<smem>>
      %149 = vector.broadcast %148 : f32 to vector<1x128xf32>
      %150 = tpu.concatenate %143, %145, %147, %149 in 0 : vector<1x128xf32>, vector<1x128xf32>, vector<1x128xf32>, vector<1x128xf32> -> vector<4x128xf32>
      %c0_51 = arith.constant 0 : index
      %c0_52 = arith.constant 0 : index
      %c0_53 = arith.constant 0 : index
      %151 = vector.load %arg8[%c0_51, %c0_52, %c0_53] : memref<1x4x128xf32, #tpu.memory_space<vmem>>, vector<1x4x128xf32>
      %152 = vector.shape_cast %151 : vector<1x4x128xf32> to vector<4x128xf32>
      %153 = vector.shape_cast %150 : vector<4x128xf32> to vector<1x4x128xf32>
      tpu.vector_store %arg8[%c0_51, %c0_52, %c0_53], %153 {strides = array<i32>} : memref<1x4x128xf32, #tpu.memory_space<vmem>>, vector<1x4x128xf32>,
    } else {
    }
    return
  }
  func.func @transform_0(%arg0: i32, %arg1: i32) -> (i32, i32) {
    %c1_i32 = arith.constant 1 : i32
    %0 = arith.muli %arg0, %c1_i32 : i32
    %1 = arith.addi %0, %arg1 : i32
    %c0_i32 = arith.constant 0 : i32
    %c0_i32_0 = arith.constant 0 : i32
    return %1, %c0_i32 : i32, i32
  }
  func.func @transform_1(%arg0: i32, %arg1: i32) -> (i32, i32, i32) {
    %c0_i32 = arith.constant 0 : i32
    %c0_i32_0 = arith.constant 0 : i32
    %c0_i32_1 = arith.constant 0 : i32
    %c0_i32_2 = arith.constant 0 : i32
    return %c0_i32, %c0_i32_0, %c0_i32_1 : i32, i32, i32
  }
  func.func @transform_2(%arg0: i32, %arg1: i32) -> (i32, i32) {
    %c1_i32 = arith.constant 1 : i32
    %0 = arith.muli %arg0, %c1_i32 : i32
    %1 = arith.addi %0, %arg1 : i32
    %c0_i32 = arith.constant 0 : i32
    %c0_i32_0 = arith.constant 0 : i32
    return %1, %c0_i32 : i32, i32
  }
  func.func @transform_3(%arg0: i32, %arg1: i32) -> (i32, i32) {
    %c1_i32 = arith.constant 1 : i32
    %0 = arith.muli %arg0, %c1_i32 : i32
    %1 = arith.addi %0, %arg1 : i32
    %c0_i32 = arith.constant 0 : i32
    %c0_i32_0 = arith.constant 0 : i32
    return %1, %c0_i32 : i32, i32
  }
  func.func @transform_4(%arg0: i32, %arg1: i32) -> (i32, i32) {
    %c1_i32 = arith.constant 1 : i32
    %0 = arith.muli %arg0, %c1_i32 : i32
    %1 = arith.addi %0, %arg1 : i32
    %c0_i32 = arith.constant 0 : i32
    %c0_i32_0 = arith.constant 0 : i32
    return %1, %c0_i32 : i32, i32
  }
  func.func @transform_5(%arg0: i32, %arg1: i32) -> (i32, i32) {
    %c0_i32 = arith.constant 0 : i32
    %c0_i32_0 = arith.constant 0 : i32
    %c0_i32_1 = arith.constant 0 : i32
    return %c0_i32, %c0_i32_0 : i32, i32
  }
  func.func @transform_6(%arg0: i32, %arg1: i32) -> (i32, i32, i32) {
    %c0_i32 = arith.constant 0 : i32
    %c0_i32_0 = arith.constant 0 : i32
    %c0_i32_1 = arith.constant 0 : i32
    return %arg0, %c0_i32, %c0_i32_0 : i32, i32, i32
  }
}

</mosaic_0001>

<llo_original>
// kernel: tpu_custom_call.1
$region0: #{tpu_custom_call.1}
  #allocation0 [shape = 'u32[]', space=smem, size = 0x4, offset = 0x4, fixed_abs, tag = 'smem constant byte address 0x4 - core index']
  #allocation1 [shape = 'u32[144,128]{1,0:T(1,128)}', space=vmem, size = 0x12000, scoped, tag = 'internal scratch']
  #allocation2 [shape = 'f32[4]{0:T(128)}', space=smem, size = 0x200, scoped, tag = 'scratch operand']
  %s0 = inlined_call_operand.hbm [shape: bf16[16,32], index: 0, kind: input, shape index: {}]
  %s1 = inlined_call_operand.hbm [shape: bf16[2,32,128], index: 1, kind: input, shape index: {}]
  %s2 = inlined_call_operand.hbm [shape: bf16[16,128], index: 2, kind: input, shape index: {}]
  %s3 = inlined_call_operand.hbm [shape: bf16[16,128], index: 3, kind: input, shape index: {}]
  %s4 = inlined_call_operand.hbm [shape: bf16[16,128], index: 4, kind: input, shape index: {}]
  %s5 = inlined_call_operand.vmem [shape: f32[1,128], index: 5, kind: input, shape index: {}]
  %s6 = inlined_call_operand.hbm [shape: f32[1,4,128], index: 6, kind: output, shape index: {}]
  %s7 = sld [smem:[#allocation0]]
  $region62: #{tpu_custom_call.1} parent=0
    _
  %s9 = ssub.s32 1, %s7
  %s10 = scalar_select 0, %s9, %s7
  $region1: #{tpu_custom_call.1} parent=0
    #allocation3 [shape = 'u8[4096]{0}', space=vmem, size = 0x1000, scoped, tag = 'input window, operand 0, single buffered']
    #allocation4 [shape = 's32[1]{0}', space=sflag, size = 0x4, scoped, tag = 'scoped memory for tpu_custom_call.1']
    #allocation5 [shape = 's32[1]{0}', space=sflag, size = 0x4, scoped, tag = 'scoped memory for tpu_custom_call.1']
    #allocation6 [shape = 'u8[16384]{0}', space=vmem, size = 0x4000, scoped, tag = 'input window, operand 1, single buffered']
    #allocation7 [shape = 's32[1]{0}', space=sflag, size = 0x4, scoped, tag = 'scoped memory for tpu_custom_call.1']
    #allocation8 [shape = 'u8[4096]{0}', space=vmem, size = 0x1000, scoped, tag = 'input window, operand 2, single buffered']
    #allocation9 [shape = 'u8[4096]{0}', space=vmem, size = 0x1000, scoped, tag = 'input window, operand 3, single buffered']
    #allocation10 [shape = 's32[1]{0}', space=sflag, size = 0x4, scoped, tag = 'scoped memory for tpu_custom_call.1']
    #allocation11 [shape = 'u8[4096]{0}', space=vmem, size = 0x1000, scoped, tag = 'input window, operand 4, single buffered']
    #allocation12 [shape = 'u8[2048]{0}', space=vmem, size = 0x800, scoped, tag = 'output window, operand 0, single buffered']
    %11 = vsyncpa [#allocation4], 0
    %12 = vsyncpa [#allocation7], 0
    %13 = vsyncpa [#allocation10], 0
    %14 = vsyncpa [#allocation5], 0
    // Predicated region
    $region2: #{tpu_custom_call.1} parent=1 // pred_check
      _
    $region3: #{tpu_custom_call.1} parent=1 // pred_check_branch
      %16 = sbr.rel (0) target = $region5
    $region4: #{tpu_custom_call.1} parent=1 // pred_region
      %s17 = sadd.s32 0, 0
      %s18 = smul.u32 2, %s17
      %s20 = ssub.s32 128, 128
      %21 = vsyncadd [#allocation4], %s20
      %s22 = smul.addr %s18, 64
      %s23 = scalar_lea.hbm %s0, %s22
      %s24 = sshll.u32 [#allocation3], 4
      %s25 = int_to_ptr.vmem [resolvable:$true] %s24
      %30 = dma.hbm_to_vmem [thread:$0]  %s23, 128, %s25, [#allocation4], 64, 64, 4
    $region5: #{tpu_custom_call.1} parent=1 // pred_fallthru
      _
    // Predicated region
    $region6: #{tpu_custom_call.1} parent=1 // pred_check
      _
    $region7: #{tpu_custom_call.1} parent=1 // pred_check_branch
      %32 = sbr.rel (0) target = $region9
    $region8: #{tpu_custom_call.1} parent=1 // pred_region
      %s34 = ssub.s32 512, 512
      %35 = vsyncadd [#allocation7], %s34
      %s36 = sshll.u32 [#allocation6], 4
      %s37 = int_to_ptr.vmem [resolvable:$true] %s36
      %42 = dma.hbm_to_vmem [thread:$0]  %s1, 512, %s37, [#allocation7], 64, 64, 4
    $region9: #{tpu_custom_call.1} parent=1 // pred_fallthru
      _
    // Predicated region
    $region10: #{tpu_custom_call.1} parent=1 // pred_check
      _
    $region11: #{tpu_custom_call.1} parent=1 // pred_check_branch
      %44 = sbr.rel (0) target = $region13
    $region12: #{tpu_custom_call.1} parent=1 // pred_region
      %s45 = sadd.s32 0, 0
      %s46 = smul.u32 2, %s45
      %s48 = ssub.s32 128, 128
      %49 = vsyncadd [#allocation7], %s48
      %s50 = smul.addr %s46, 64
      %s51 = scalar_lea.hbm %s2, %s50
      %s52 = sshll.u32 [#allocation8], 4
      %s53 = int_to_ptr.vmem [resolvable:$true] %s52
      %58 = dma.hbm_to_vmem [thread:$0]  %s51, 128, %s53, [#allocation7], 64, 64, 4
    $region13: #{tpu_custom_call.1} parent=1 // pred_fallthru
      _
    // Predicated region
    $region14: #{tpu_custom_call.1} parent=1 // pred_check
      _
    $region15: #{tpu_custom_call.1} parent=1 // pred_check_branch
      %60 = sbr.rel (0) target = $region17
    $region16: #{tpu_custom_call.1} parent=1 // pred_region
      %s61 = sadd.s32 0, 0
      %s62 = smul.u32 2, %s61
      %s64 = ssub.s32 128, 128
      %65 = vsyncadd [#allocation10], %s64
      %s66 = smul.addr %s62, 64
      %s67 = scalar_lea.hbm %s3, %s66
      %s68 = sshll.u32 [#allocation9], 4
      %s69 = int_to_ptr.vmem [resolvable:$true] %s68
      %74 = dma.hbm_to_vmem [thread:$0]  %s67, 128, %s69, [#allocation10], 64, 64, 4
    $region17: #{tpu_custom_call.1} parent=1 // pred_fallthru
      _
    // Predicated region
    $region18: #{tpu_custom_call.1} parent=1 // pred_check
      _
    $region19: #{tpu_custom_call.1} parent=1 // pred_check_branch
      %76 = sbr.rel (0) target = $region21
    $region20: #{tpu_custom_call.1} parent=1 // pred_region
      %s77 = sadd.s32 0, 0
      %s78 = smul.u32 2, %s77
      %s80 = ssub.s32 128, 128
      %81 = vsyncadd [#allocation10], %s80
      %s82 = smul.addr %s78, 64
      %s83 = scalar_lea.hbm %s4, %s82
      %s84 = sshll.u32 [#allocation11], 4
      %s85 = int_to_ptr.vmem [resolvable:$true] %s84
      %90 = dma.hbm_to_vmem [thread:$0]  %s83, 128, %s85, [#allocation10], 64, 64, 4
    $region21: #{tpu_custom_call.1} parent=1 // pred_fallthru
      _
    // Predicated region
    $region22: #{tpu_custom_call.1} parent=1 // pred_check
      _
    $region23: #{tpu_custom_call.1} parent=1 // pred_check_branch
      %92 = sbr.rel (0) target = $region25
    $region24: #{tpu_custom_call.1} parent=1 // pred_region
      _
    $region25: #{tpu_custom_call.1} parent=1 // pred_fallthru
      _
    // Predicated region
    $region26: #{tpu_custom_call.1} parent=1 // pred_check
      _
    $region27: #{tpu_custom_call.1} parent=1 // pred_check_branch
      %94 = sbr.rel (0) target = $region29
    $region28: #{tpu_custom_call.1} parent=1 // pred_region
      %95 = dma.done [#allocation4], 128
    $region29: #{tpu_custom_call.1} parent=1 // pred_fallthru
      _
    // Predicated region
    $region30: #{tpu_custom_call.1} parent=1 // pred_check
      _
    $region31: #{tpu_custom_call.1} parent=1 // pred_check_branch
      %97 = sbr.rel (0) target = $region33
    $region32: #{tpu_custom_call.1} parent=1 // pred_region
      %98 = dma.done [#allocation7], 512
    $region33: #{tpu_custom_call.1} parent=1 // pred_fallthru
      _
    // Predicated region
    $region34: #{tpu_custom_call.1} parent=1 // pred_check
      _
    $region35: #{tpu_custom_call.1} parent=1 // pred_check_branch
      %100 = sbr.rel (0) target = $region37
    $region36: #{tpu_custom_call.1} parent=1 // pred_region
      %101 = dma.done [#allocation7], 128
    $region37: #{tpu_custom_call.1} parent=1 // pred_fallthru
      _
    // Predicated region
    $region38: #{tpu_custom_call.1} parent=1 // pred_check
      _
    $region39: #{tpu_custom_call.1} parent=1 // pred_check_branch
      %103 = sbr.rel (0) target = $region41
    $region40: #{tpu_custom_call.1} parent=1 // pred_region
      %104 = dma.done [#allocation10], 128
    $region41: #{tpu_custom_call.1} parent=1 // pred_fallthru
      _
    // Predicated region
    $region42: #{tpu_custom_call.1} parent=1 // pred_check
      _
    $region43: #{tpu_custom_call.1} parent=1 // pred_check_branch
      %106 = sbr.rel (0) target = $region45
    $region44: #{tpu_custom_call.1} parent=1 // pred_region
      %107 = dma.done [#allocation10], 128
    $region45: #{tpu_custom_call.1} parent=1 // pred_fallthru
      _
    %s108 = sadd.s32 0, 0
    %s109 = smul.u32 2, %s108
    %s110 = sadd.s32 0, 0
    %s111 = smul.u32 2, %s110
    %s112 = sadd.s32 0, 0
    %s113 = smul.u32 2, %s112
    %s114 = sadd.s32 0, 0
    %s115 = smul.u32 2, %s114
    %p117 = scmp.eq.s32.totalorder 0, 0
    // Predicated region
    $region46: #{tpu_custom_call.1} parent=1 // pred_check
      %p118 = pneg %p117
    $region47: #{tpu_custom_call.1} parent=1 // pred_check_branch
      %120 = sbr.rel (%p118) target = $region49
    $region48: #{tpu_custom_call.1} parent=1 // pred_region
      %s121 = scalar_lea.smem [#allocation2], 0
      %122 = sst [smem:[%s121]] 0.0
      %s123 = scalar_lea.smem [#allocation2], 1
      %124 = sst [smem:[%s123]] 0.0
      %s125 = scalar_lea.smem [#allocation2], 2
      %126 = sst [smem:[%s125]] 0.0
      %s127 = scalar_lea.smem [#allocation2], 3
      %128 = sst [smem:[%s127]] 0.0
    $region49: #{tpu_custom_call.1} parent=1 // pred_fallthru
      _
    %s129 = sadd.s32 0, 0
    %s130 = smul.u32 %s129, 16
    %v131 = vlaneseq
    %v132 = vshrl.u32 %v131, 7
    %v133 = vadd.s32 %v132, 8
    %v134 = vstv %s130
    %v135 = vadd.s32 %v132, %v134
    %v136 = vadd.s32 %v133, %v134
    %vm137 = vcmp.lt.s32.totalorder %v135, 8
    %vm138 = vcmp.lt.s32.totalorder %v136, 8
    %v139 = vsel %vm137, 1, 0
    %v140 = vsel %vm138, 1, 0
    %v141 = vcvt.s32.f32 %v139
    %v142 = vcvt.s32.f32 %v140
    %v143 = vld [vmem:[#allocation8] sm:$0xf]
    %v144 = vld [vmem:[#allocation8 + $0x4] sm:$0xf]
    %v145 = vunpack.c.l.bf16 %v143
    %v146 = vunpack.c.l.bf16 %v144
    %v147 = vld [vmem:[#allocation9] sm:$0xf]
    %v148 = vld [vmem:[#allocation9 + $0x4] sm:$0xf]
    %v149 = vunpack.c.l.bf16 %v147
    %v150 = vunpack.c.l.bf16 %v148
    %v151 = vld [vmem:[#allocation11] sm:$0xf]
    %v152 = vld [vmem:[#allocation11 + $0x4] sm:$0xf]
    %v153 = vunpack.c.l.bf16 %v151
    %v154 = vunpack.c.l.bf16 %v152
    %v155 = vld [vmem:[%s5] sm:$0x1]
    %v156 = vlog2.pop %v155
    %v157 = vmul.f32 %v156, 0.6931472
    %v158 = vld [vmem:[#allocation3] sm:$0xf]
    %v159 = vld [vmem:[#allocation3 + $0x4] sm:$0xf]
    %v160 = vld [vmem:[#allocation6] sm:$0xf]
    %v161 = vld [vmem:[#allocation6 + $0x4] sm:$0xf]
    %v162 = vld [vmem:[#allocation6 + $0x8] sm:$0xf]
    %v163 = vld [vmem:[#allocation6 + $0xc] sm:$0xf]
    %v166 = vunpack.c.l.b16 %v158
    %v167 = vunpack.c.l.b16 %v159
    %v168 = vpack.c.b16 %v167, %v166
    %v173 = vunpack.c.l.b16 %v160
    %v174 = vunpack.c.l.b16 %v161
    %v175 = vunpack.c.l.b16 %v162
    %v176 = vunpack.c.l.b16 %v163
    %v177 = vpack.c.b16 %v174, %v173
    %v178 = vpack.c.b16 %v176, %v175
    %vm181 = vcmask 261120
    %v183 = vsel %vm181, %v168, 0
    %185 = vmatprep.subr.bf16.mxu0 0
    %186 = vmatpush1.bf16.msra.mxu0 0
    %187 = vmatprep.subr.bf16.mxu0 0
    %188 = vmatpush1.bf16.msra.mxu0 0
    %189 = vmatprep.subr.bf16.mxu0 0
    %190 = vmatpush1.bf16.msra.mxu0 0
    %191 = vmatprep.subr.bf16.mxu0 0
    %192 = vmatpush1.bf16.msra.mxu0 0
    %193 = vmatprep.subr.bf16.mxu0 0
    %194 = vmatpush1.bf16.msra.mxu0 0
    %195 = vmatprep.subr.bf16.mxu0 0
    %196 = vmatpush1.bf16.msra.mxu0 0
    %197 = vmatprep.subr.bf16.mxu0 0
    %198 = vmatpush1.bf16.msra.mxu0 %v178
    %199 = vmatprep.subr.bf16.mxu0 0
    %200 = vmatpush1.bf16.msra.mxu0 %v177
    %201 = vmatprep.subr.bf16.mxu0 0
    %202 = vmatpush2.bf16.msra.mxu0 0
    %203 = vmatprep.subr.bf16.mxu0 0
    %204 = vmatpush2.bf16.msra.mxu0 0
    %205 = vmatprep.subr.bf16.mxu0 0
    %206 = vmatpush2.bf16.msra.mxu0 0
    %207 = vmatprep.subr.bf16.mxu0 0
    %208 = vmatpush2.bf16.msra.mxu0 0
    %209 = vmatprep.subr.bf16.mxu0 0
    %210 = vmatpush2.bf16.msra.mxu0 0
    %211 = vmatprep.subr.bf16.mxu0 0
    %212 = vmatpush2.bf16.msra.mxu0 0
    %213 = vmatprep.subr.bf16.mxu0 0
    %214 = vmatpush2.bf16.msra.mxu0 0
    %215 = vmatprep.subr.bf16.mxu0 0
    %216 = vmatpush2.bf16.msra.mxu0 0
    %217 = vmatprep.mubr.bf16.mxu0 0
    %218 = vmatmul.mubr.bf16.gmra.mxu0 %v183
    %v219 = vpop.f32.mrf.mxu0
    %v220 = vadd.f32 0.0, %v219
    %v221 = vpop.f32.mrf.mxu0
    %v222 = vpop.f32.mrf.mxu0
    %v223 = vadd.f32 0.0, %v222
    %v224 = vpop.f32.mrf.mxu0
    %225 = vdwg.mxu0
    %s226 = scalar_lea.vmem [#allocation6], 16
    %v227 = vld [vmem:[%s226] sm:$0xf]
    %v228 = vld [vmem:[%s226 + $0x4] sm:$0xf]
    %v229 = vld [vmem:[%s226 + $0x8] sm:$0xf]
    %v230 = vld [vmem:[%s226 + $0xc] sm:$0xf]
    %v235 = vunpack.c.l.b16 %v227
    %v236 = vunpack.c.l.b16 %v228
    %v237 = vunpack.c.l.b16 %v229
    %v238 = vunpack.c.l.b16 %v230
    %v239 = vpack.c.b16 %v236, %v235
    %v240 = vpack.c.b16 %v238, %v237
    %243 = vmatprep.subr.bf16.mxu0 0
    %244 = vmatpush1.bf16.msra.mxu0 0
    %245 = vmatprep.subr.bf16.mxu0 0
    %246 = vmatpush1.bf16.msra.mxu0 0
    %247 = vmatprep.subr.bf16.mxu0 0
    %248 = vmatpush1.bf16.msra.mxu0 0
    %249 = vmatprep.subr.bf16.mxu0 0
    %250 = vmatpush1.bf16.msra.mxu0 0
    %251 = vmatprep.subr.bf16.mxu0 0
    %252 = vmatpush1.bf16.msra.mxu0 0
    %253 = vmatprep.subr.bf16.mxu0 0
    %254 = vmatpush1.bf16.msra.mxu0 0
    %255 = vmatprep.subr.bf16.mxu0 0
    %256 = vmatpush1.bf16.msra.mxu0 %v240
    %257 = vmatprep.subr.bf16.mxu0 0
    %258 = vmatpush1.bf16.msra.mxu0 %v239
    %259 = vmatprep.subr.bf16.mxu0 0
    %260 = vmatpush2.bf16.msra.mxu0 0
    %261 = vmatprep.subr.bf16.mxu0 0
    %262 = vmatpush2.bf16.msra.mxu0 0
    %263 = vmatprep.subr.bf16.mxu0 0
    %264 = vmatpush2.bf16.msra.mxu0 0
    %265 = vmatprep.subr.bf16.mxu0 0
    %266 = vmatpush2.bf16.msra.mxu0 0
    %267 = vmatprep.subr.bf16.mxu0 0
    %268 = vmatpush2.bf16.msra.mxu0 0
    %269 = vmatprep.subr.bf16.mxu0 0
    %270 = vmatpush2.bf16.msra.mxu0 0
    %271 = vmatprep.subr.bf16.mxu0 0
    %272 = vmatpush2.bf16.msra.mxu0 0
    %273 = vmatprep.subr.bf16.mxu0 0
    %274 = vmatpush2.bf16.msra.mxu0 0
    %275 = vmatprep.mubr.bf16.mxu0 0
    %276 = vmatmul.mubr.bf16.gmra.mxu0 %v183
    %v277 = vpop.f32.mrf.mxu0
    %v278 = vadd.f32 0.0, %v277
    %v279 = vpop.f32.mrf.mxu0
    %v280 = vpop.f32.mrf.mxu0
    %v281 = vadd.f32 0.0, %v280
    %v282 = vpop.f32.mrf.mxu0
    %283 = vdwg.mxu0
    %284 = vadd.xlane.f32.xlu0 %v153
    %v285 = vpop.xlane.xlu0 %284
    %286 = vadd.xlane.f32.xlu0 %v154
    %v287 = vpop.xlane.xlu0 %286
    %vm288 = vcmp.gt.f32.partialorder %v285, 0.0
    %vm289 = vcmp.gt.f32.partialorder %v287, 0.0
    %v290 = vsel %vm288, %v285, 1.0
    %v291 = vsel %vm289, %v287, 1.0
    %v292 = vrcp.pop %v290
    %v293 = vmul.f32 %v153, %v292
    %v294 = vrcp.pop %v291
    %v295 = vmul.f32 %v154, %v294
    %v297 = vlaneseq
    %v298 = vshrl.u32 %v297, 7
    %v299 = vsub.s32 0, %v298
    %v300 = vrot.slane %v157, %v299
    %v302 = vadd.f32 %v145, %v300
    %v303 = vadd.f32 %v146, %v300
    %304 = vmax.xlane.f32.xlu0 %v302
    %v305 = vpop.xlane.xlu0 %304
    %306 = vmax.xlane.f32.xlu0 %v303
    %v307 = vpop.xlane.xlu0 %306
    %v308 = vsub.f32 %v302, %v305
    %v309 = vsub.f32 %v303, %v307
    %v310 = vmul.f32 %v308, 1.442695
    %v311 = vpow.pop %v310
    %v312 = vmul.f32 %v309, 1.442695
    %v313 = vpow.pop %v312
    %314 = vadd.xlane.f32.xlu0 %v311
    %v315 = vpop.xlane.xlu0 %314
    %316 = vadd.xlane.f32.xlu0 %v313
    %v317 = vpop.xlane.xlu0 %316
    %v318 = vadd.f32 %v149, %v300
    %v319 = vadd.f32 %v150, %v300
    %320 = vmax.xlane.f32.xlu0 %v318
    %v321 = vpop.xlane.xlu0 %320
    %322 = vmax.xlane.f32.xlu0 %v319
    %v323 = vpop.xlane.xlu0 %322
    %v324 = vsub.f32 %v318, %v321
    %v325 = vsub.f32 %v319, %v323
    %v326 = vmul.f32 %v324, 1.442695
    %v327 = vpow.pop %v326
    %v328 = vmul.f32 %v325, 1.442695
    %v329 = vpow.pop %v328
    %330 = vadd.xlane.f32.xlu0 %v327
    %v331 = vpop.xlane.xlu0 %330
    %332 = vadd.xlane.f32.xlu0 %v329
    %v333 = vpop.xlane.xlu0 %332
    %v334 = vlog2.pop %v315
    %v335 = vmul.f32 %v334, 0.6931472
    %v336 = vlog2.pop %v317
    %v337 = vmul.f32 %v336, 0.6931472
    %v338 = vmul.f32 %v293, %v308
    %v339 = vmul.f32 %v295, %v309
    %340 = vadd.xlane.f32.xlu0 %v338
    %v341 = vpop.xlane.xlu0 %340
    %342 = vadd.xlane.f32.xlu0 %v339
    %v343 = vpop.xlane.xlu0 %342
    %v344 = vsub.f32 %v335, %v341
    %v345 = vsub.f32 %v337, %v343
    %v346 = vlog2.pop %v331
    %v347 = vmul.f32 %v346, 0.6931472
    %v348 = vlog2.pop %v333
    %v349 = vmul.f32 %v348, 0.6931472
    %v350 = vmul.f32 %v293, %v324
    %v351 = vmul.f32 %v295, %v325
    %352 = vadd.xlane.f32.xlu0 %v350
    %v353 = vpop.xlane.xlu0 %352
    %354 = vadd.xlane.f32.xlu0 %v351
    %v355 = vpop.xlane.xlu0 %354
    %v356 = vsub.f32 %v347, %v353
    %v357 = vsub.f32 %v349, %v355
    %358 = vmax.xlane.f32.xlu0 %v220
    %v359 = vpop.xlane.xlu0 %358
    %360 = vmax.xlane.f32.xlu0 %v223
    %v361 = vpop.xlane.xlu0 %360
    %v362 = vsub.f32 %v220, %v359
    %v363 = vsub.f32 %v223, %v361
    %v364 = vmul.f32 %v362, 1.442695
    %v365 = vpow.pop %v364
    %v366 = vmul.f32 %v363, 1.442695
    %v367 = vpow.pop %v366
    %368 = vadd.xlane.f32.xlu0 %v365
    %v369 = vpop.xlane.xlu0 %368
    %370 = vadd.xlane.f32.xlu0 %v367
    %v371 = vpop.xlane.xlu0 %370
    %v372 = vrcp.pop %v369
    %v373 = vmul.f32 %v365, %v372
    %v374 = vrcp.pop %v371
    %v375 = vmul.f32 %v367, %v374
    %376 = vmax.xlane.f32.xlu0 %v145
    %v377 = vpop.xlane.xlu0 %376
    %378 = vmax.xlane.f32.xlu0 %v146
    %v379 = vpop.xlane.xlu0 %378
    %v380 = vsub.f32 %v145, %v377
    %v381 = vsub.f32 %v146, %v379
    %v382 = vmul.f32 %v380, 1.442695
    %v383 = vpow.pop %v382
    %v384 = vmul.f32 %v381, 1.442695
    %v385 = vpow.pop %v384
    %386 = vadd.xlane.f32.xlu0 %v383
    %v387 = vpop.xlane.xlu0 %386
    %388 = vadd.xlane.f32.xlu0 %v385
    %v389 = vpop.xlane.xlu0 %388
    %v390 = vlog2.pop %v387
    %v391 = vmul.f32 %v390, 0.6931472
    %v392 = vlog2.pop %v389
    %v393 = vmul.f32 %v392, 0.6931472
    %v394 = vmul.f32 %v373, %v380
    %v395 = vmul.f32 %v375, %v381
    %396 = vadd.xlane.f32.xlu0 %v394
    %v397 = vpop.xlane.xlu0 %396
    %398 = vadd.xlane.f32.xlu0 %v395
    %v399 = vpop.xlane.xlu0 %398
    %v400 = vsub.f32 %v391, %v397
    %v401 = vsub.f32 %v393, %v399
    %402 = vmax.xlane.f32.xlu0 %v278
    %v403 = vpop.xlane.xlu0 %402
    %404 = vmax.xlane.f32.xlu0 %v281
    %v405 = vpop.xlane.xlu0 %404
    %v406 = vsub.f32 %v278, %v403
    %v407 = vsub.f32 %v281, %v405
    %v408 = vmul.f32 %v406, 1.442695
    %v409 = vpow.pop %v408
    %v410 = vmul.f32 %v407, 1.442695
    %v411 = vpow.pop %v410
    %412 = vadd.xlane.f32.xlu0 %v409
    %v413 = vpop.xlane.xlu0 %412
    %414 = vadd.xlane.f32.xlu0 %v411
    %v415 = vpop.xlane.xlu0 %414
    %v416 = vrcp.pop %v413
    %v417 = vmul.f32 %v409, %v416
    %v418 = vrcp.pop %v415
    %v419 = vmul.f32 %v411, %v418
    %420 = vmax.xlane.f32.xlu0 %v149
    %v421 = vpop.xlane.xlu0 %420
    %422 = vmax.xlane.f32.xlu0 %v150
    %v423 = vpop.xlane.xlu0 %422
    %v424 = vsub.f32 %v149, %v421
    %v425 = vsub.f32 %v150, %v423
    %v426 = vmul.f32 %v424, 1.442695
    %v427 = vpow.pop %v426
    %v428 = vmul.f32 %v425, 1.442695
    %v429 = vpow.pop %v428
    %430 = vadd.xlane.f32.xlu0 %v427
    %v431 = vpop.xlane.xlu0 %430
    %432 = vadd.xlane.f32.xlu0 %v429
    %v433 = vpop.xlane.xlu0 %432
    %v434 = vlog2.pop %v431
    %v435 = vmul.f32 %v434, 0.6931472
    %v436 = vlog2.pop %v433
    %v437 = vmul.f32 %v436, 0.6931472
    %v438 = vmul.f32 %v417, %v424
    %v439 = vmul.f32 %v419, %v425
    %440 = vadd.xlane.f32.xlu0 %v438
    %v441 = vpop.xlane.xlu0 %440
    %442 = vadd.xlane.f32.xlu0 %v439
    %v443 = vpop.xlane.xlu0 %442
    %v444 = vsub.f32 %v435, %v441
    %v445 = vsub.f32 %v437, %v443
    %s446 = sld [smem:[#allocation2]]
    %v447 = vmul.f32 %v141, %v344
    %v448 = vmul.f32 %v142, %v345
    %vm449 = vcmask 7168
    %v450 = vsel %vm449, %v447, 0.0
    %v451 = vsel %vm449, %v448, 0.0
    %v452 = vadd.f32 %v450, %v451
    %453 = vadd.xlane.f32.xlu0 %v452
    %v454 = vpop.xlane.xlu0 %453
    %v455 = vrot.slane %v454, 4
    %v456 = vadd.f32 %v454, %v455
    %v457 = vrot.slane %v456, 2
    %v458 = vadd.f32 %v456, %v457
    %v459 = vrot.slane %v458, 1
    %v460 = vadd.f32 %v458, %v459
    %s461 = vtos %v460
    %s462 = sadd.f32 %s446, %s461
    %s463 = scalar_lea.smem [#allocation2], 0
    %464 = sst [smem:[%s463]] %s462
    %s465 = sld [smem:[#allocation2 + $0x1]]
    %v466 = vmul.f32 %v141, %v356
    %v467 = vmul.f32 %v142, %v357
    %v468 = vsel %vm449, %v466, 0.0
    %v469 = vsel %vm449, %v467, 0.0
    %v470 = vadd.f32 %v468, %v469
    %471 = vadd.xlane.f32.xlu0 %v470
    %v472 = vpop.xlane.xlu0 %471
    %v473 = vrot.slane %v472, 4
    %v474 = vadd.f32 %v472, %v473
    %v475 = vrot.slane %v474, 2
    %v476 = vadd.f32 %v474, %v475
    %v477 = vrot.slane %v476, 1
    %v478 = vadd.f32 %v476, %v477
    %s479 = vtos %v478
    %s480 = sadd.f32 %s465, %s479
    %s481 = scalar_lea.smem [#allocation2], 1
    %482 = sst [smem:[%s481]] %s480
    %s483 = sld [smem:[#allocation2 + $0x2]]
    %v484 = vmul.f32 %v141, %v400
    %v485 = vmul.f32 %v142, %v401
    %v486 = vsel %vm449, %v484, 0.0
    %v487 = vsel %vm449, %v485, 0.0
    %v488 = vadd.f32 %v486, %v487
    %489 = vadd.xlane.f32.xlu0 %v488
    %v490 = vpop.xlane.xlu0 %489
    %v491 = vrot.slane %v490, 4
    %v492 = vadd.f32 %v490, %v491
    %v493 = vrot.slane %v492, 2
    %v494 = vadd.f32 %v492, %v493
    %v495 = vrot.slane %v494, 1
    %v496 = vadd.f32 %v494, %v495
    %s497 = vtos %v496
    %s498 = sadd.f32 %s483, %s497
    %s499 = scalar_lea.smem [#allocation2], 2
    %500 = sst [smem:[%s499]] %s498
    %s501 = sld [smem:[#allocation2 + $0x3]]
    %v502 = vmul.f32 %v141, %v444
    %v503 = vmul.f32 %v142, %v445
    %v504 = vsel %vm449, %v502, 0.0
    %v505 = vsel %vm449, %v503, 0.0
    %v506 = vadd.f32 %v504, %v505
    %507 = vadd.xlane.f32.xlu0 %v506
    %v508 = vpop.xlane.xlu0 %507
    %v509 = vrot.slane %v508, 4
    %v510 = vadd.f32 %v508, %v509
    %v511 = vrot.slane %v510, 2
    %v512 = vadd.f32 %v510, %v511
    %v513 = vrot.slane %v512, 1
    %v514 = vadd.f32 %v512, %v513
    %s515 = vtos %v514
    %s516 = sadd.f32 %s501, %s515
    %s517 = scalar_lea.smem [#allocation2], 3
    %518 = sst [smem:[%s517]] %s516
    // Predicated region
    $region50: #{tpu_custom_call.1} parent=1 // pred_check
      %p519 = pneg %p117
    $region51: #{tpu_custom_call.1} parent=1 // pred_check_branch
      %521 = sbr.rel (%p519) target = $region53
    $region52: #{tpu_custom_call.1} parent=1 // pred_region
      %s522 = sld [smem:[#allocation2]]
      %v523 = vstv %s522
      %s524 = sld [smem:[#allocation2 + $0x1]]
      %v525 = vstv %s524
      %s526 = sld [smem:[#allocation2 + $0x2]]
      %v527 = vstv %s526
      %s528 = sld [smem:[#allocation2 + $0x3]]
      %v529 = vstv %s528
      %vm530 = vcmask 1040384
      %v531 = vsel %vm530, %v523, %v525
      %vm532 = vcmask 1041408
      %v533 = vsel %vm532, %v531, %v527
      %vm534 = vcmask 1042432
      %v535 = vsel %vm534, %v533, %v529
      %536 = vst [vmem:[#allocation12] sm:$0xf] %v535
    $region53: #{tpu_custom_call.1} parent=1 // pred_fallthru
      _
    // Predicated region
    $region54: #{tpu_custom_call.1} parent=1 // pred_check
      _
    $region55: #{tpu_custom_call.1} parent=1 // pred_check_branch
      %538 = sbr.rel (0) target = $region57
    $region56: #{tpu_custom_call.1} parent=1 // pred_region
      %s540 = ssub.s32 64, 64
      %541 = vsyncadd [#allocation5], %s540
      %s543 = sshll.u32 [#allocation12], 4
      %s544 = int_to_ptr.vmem [resolvable:$true] %s543
      %546 = dma.vmem_to_hbm [thread:$0]  %s544, 64, %s6, [#allocation5]
    $region57: #{tpu_custom_call.1} parent=1 // pred_fallthru
      _
    // Predicated region
    $region58: #{tpu_custom_call.1} parent=1 // pred_check
      _
    $region59: #{tpu_custom_call.1} parent=1 // pred_check_branch
      %548 = sbr.rel (0) target = $region61
    $region60: #{tpu_custom_call.1} parent=1 // pred_region
      %549 = dma.done [#allocation5], 64
    $region61: #{tpu_custom_call.1} parent=1 // pred_fallthru
      _
    %550 = vsyncpa [#allocation4], 1
    %551 = vsyncpa [#allocation7], 1
    %552 = vsyncpa [#allocation10], 1
    %553 = vsyncpa [#allocation5], 1

</llo_original>
